<compile_context>
chip_gen: v7x
topology: tpu7x:2x2x1
jax: 0.10.0
libtpu: 0.0.40
codegen_flags: <defaults>
</compile_context>

<pallas_src>
import jax
import jax.numpy as jnp
from jax.experimental import pallas as pl
from jax.experimental.pallas import tpu as pltpu

IN_F = 10                 # dense0 in_features
HID = 8                   # dense0 out_features
FOLD = 8                  # batch rows folded into the lane dimension
IN_FOLD = IN_F * FOLD     # 80
HID_FOLD = HID * FOLD     # 64
TILE = 4096               # folded rows per grid step (= FOLD * TILE original rows)


def mlp_kernel(x_ref, w0_ref, b0_ref, w1_ref, o_ref):
    # dense0 on the MXU: bf16 operands (weights pre-cast in the wrapper), f32 accumulate.
    h = jnp.dot(x_ref[...].astype(jnp.bfloat16), w0_ref[...],
                preferred_element_type=jnp.float32)                     # (tile, 64)
    # bias + tanh in f32 (VPU + EUP; safe on v5e which lacks bf16 for these units).
    h = jnp.tanh(h + b0_ref[...])
    # last layer also on the MXU via the block-diagonal (64, 8) weight.
    o_ref[...] = jnp.dot(h, w1_ref[...], preferred_element_type=jnp.float32)  # (tile, 8)


def _pallas_mlp(xf, w0_bd, b0_t, w1_bd):
    rows = xf.shape[0]
    # Small inputs: one full-extent block (always a legal block shape).
    # Large inputs: TILE-row blocks; a non-divisible last block is a partial block
    # handled by Pallas, so no padded copy of x is ever materialized.
    tile = TILE if rows > TILE else rows
    grid = (pl.cdiv(rows, tile),)
    return pl.pallas_call(
        mlp_kernel,
        out_shape=jax.ShapeDtypeStruct((rows, FOLD), jnp.float32),
        grid=grid,
        in_specs=[
            pl.BlockSpec((tile, IN_FOLD), lambda i: (i, 0)),      # x: streamed per tile
            pl.BlockSpec((IN_FOLD, HID_FOLD), lambda i: (0, 0)),  # W0_bd (bf16): resident
            pl.BlockSpec((1, HID_FOLD), lambda i: (0, 0)),        # b0 tile: resident
            pl.BlockSpec((HID_FOLD, FOLD), lambda i: (0, 0)),     # W1_bd: resident
        ],
        out_specs=pl.BlockSpec((tile, FOLD), lambda i: (i, 0)),
        compiler_params=pltpu.CompilerParams(
            dimension_semantics=("parallel",),   # v7x: both TensorCores; neutral on v5e/v6e
            vmem_limit_bytes=32 * 1024 * 1024,   # ~8-9 MiB actually used incl. lane padding
        ),
    )(xf, w0_bd, b0_t, w1_bd)


def _forward_impl(x, params):
    w0, b0, w1, w0_bd, b0_t, w1_bd = params
    B = x.shape[0]
    B8 = (B // FOLD) * FOLD

    if B8 == B:
        # Common case: zero-copy fold (row-major reshape is a free view).
        xf = x.reshape(B // FOLD, IN_FOLD)
        return _pallas_mlp(xf, w0_bd, b0_t, w1_bd).reshape(B, 1)

    outs = []
    if B8 > 0:
        xf = x[:B8].reshape(B8 // FOLD, IN_FOLD)
        outs.append(_pallas_mlp(xf, w0_bd, b0_t, w1_bd).reshape(B8, 1))
    # Ragged tail (< 8 rows): tiny plain-jnp epilogue instead of a whole-array pad copy.
    outs.append(jnp.tanh(x[B8:] @ w0 + b0) @ w1)
    return jnp.concatenate(outs, axis=0)


neural_network_forward = jax.jit(_forward_impl)


def init_params(key):
    # Mimics torch.nn.Linear init: U(-1/sqrt(fan_in), 1/sqrt(fan_in)); stored as (in, out).
    k0, k1, k2 = jax.random.split(key, 3)
    bound0 = 1.0 / jnp.sqrt(float(IN_F))
    bound1 = 1.0 / jnp.sqrt(float(HID))
    w0 = jax.random.uniform(k0, (IN_F, HID), jnp.float32, -bound0, bound0)
    b0 = jax.random.uniform(k1, (1, HID), jnp.float32, -bound0, bound0)
    w1 = jax.random.uniform(k2, (HID, 1), jnp.float32, -bound1, bound1)
    return w0, b0, w1


def fold_params(w0, b0, w1):
    """Build the lane-folded weights once; done outside the kernel / per-step path."""
    eye = jnp.eye(FOLD, dtype=jnp.float32)
    w0_bd = jnp.kron(eye, w0).astype(jnp.bfloat16)   # (80, 64) block-diag, pre-cast once
    b0_t = jnp.tile(b0.reshape(1, HID), (1, FOLD))   # (1, 64)
    w1_bd = jnp.kron(eye, w1)                        # (64, 8) block-diag, f32
    return (w0, b0.reshape(1, HID), w1, w0_bd, b0_t, w1_bd)


if __name__ == "__main__":
    key = jax.random.PRNGKey(0)
    kx, kp = jax.random.split(key)

    params = fold_params(*init_params(kp))
    w0, b0, w1 = params[0], params[1], params[2]

    def ref_f32(xx):
        return jnp.tanh(xx @ w0 + b0) @ w1

    def ref_bf16(xx):  # matches the kernel's bf16-operand / f32-accumulate layer 1
        h = jnp.dot(xx.astype(jnp.bfloat16), w0.astype(jnp.bfloat16),
                    preferred_element_type=jnp.float32) + b0
        return jnp.tanh(h) @ w1

    # Small batch (multiple of 8) -> zero-copy folded fast path, single grid step.
    B = 64
    x = jax.random.normal(kx, (B, IN_F), jnp.float32)
    out = jax.block_until_ready(neural_network_forward(x, params))
    assert out.shape == (B, 1)
    assert jnp.allclose(out, ref_bf16(x), atol=2e-2), "mismatch vs bf16-matched reference"
    assert jnp.allclose(out, ref_f32(x), atol=5e-2), "mismatch vs f32 reference"

    # Ragged batch -> folded main part + tiny jnp tail epilogue (no whole-array pad).
    Br = 37
    xr = jax.random.normal(kx, (Br, IN_F), jnp.float32)
    outr = jax.block_until_ready(neural_network_forward(xr, params))
    assert outr.shape == (Br, 1)
    assert jnp.allclose(outr, ref_f32(xr), atol=5e-2), "mismatch on ragged batch"

    print("KERNEL_OK")
</pallas_src>

<mosaic_0001>
module attributes {stable_mosaic.version = 11 : i64} {
  func.func @mlp_kernel(%arg0: i32, %arg1: memref<8x80xf32, #tpu.memory_space<vmem>>, %arg2: memref<80x64xbf16, #tpu.memory_space<vmem>>, %arg3: memref<1x64xf32, #tpu.memory_space<vmem>>, %arg4: memref<64x8xf32, #tpu.memory_space<vmem>>, %arg5: memref<8x8xf32, #tpu.memory_space<vmem>>) attributes {dimension_semantics = [#tpu.dimension_semantics<parallel>], iteration_bounds = array<i64: 1>, scalar_prefetch = 0 : i64, scratch_operands = 0 : i64, tpu.core_type = #tpu.core_type<tc>, window_params = [{transform_indices = @transform_0, window_bounds = array<i64: 8, 80>}, {pipeline_mode = #tpu.pipeline_mode<synchronous>, transform_indices = @transform_1, window_bounds = array<i64: 80, 64>}, {pipeline_mode = #tpu.pipeline_mode<synchronous>, transform_indices = @transform_2, window_bounds = array<i64: 1, 64>}, {pipeline_mode = #tpu.pipeline_mode<synchronous>, transform_indices = @transform_3, window_bounds = array<i64: 64, 8>}, {transform_indices = @transform_4, window_bounds = array<i64: 8, 8>}]} {
    %c0 = arith.constant 0 : index
    %c0_0 = arith.constant 0 : index
    %0 = vector.load %arg1[%c0, %c0_0] : memref<8x80xf32, #tpu.memory_space<vmem>>, vector<8x80xf32>
    %1 = arith.truncf %0 : vector<8x80xf32> to vector<8x80xbf16>
    %c0_1 = arith.constant 0 : index
    %c0_2 = arith.constant 0 : index
    %2 = vector.load %arg2[%c0_1, %c0_2] : memref<80x64xbf16, #tpu.memory_space<vmem>>, vector<80x64xbf16>
    %cst = arith.constant dense<0.000000e+00> : vector<8x64xf32>
    %3 = tpu.matmul %1, %2, %cst {dimension_numbers = #tpu.dot_dimension_numbers<[1], [0], [0], [1], [0, 0, 1, 1], [], []>} : vector<8x80xbf16>, vector<80x64xbf16>, vector<8x64xf32> -> vector<8x64xf32>
    %c0_3 = arith.constant 0 : index
    %c0_4 = arith.constant 0 : index
    %4 = vector.load %arg3[%c0_3, %c0_4] : memref<1x64xf32, #tpu.memory_space<vmem>>, vector<1x64xf32>
    %5 = vector.broadcast %4 : vector<1x64xf32> to vector<8x64xf32>
    %6 = arith.addf %3, %5 : vector<8x64xf32>
    %7 = math.tanh %6 : vector<8x64xf32>
    %c0_5 = arith.constant 0 : index
    %c0_6 = arith.constant 0 : index
    %8 = vector.load %arg4[%c0_5, %c0_6] : memref<64x8xf32, #tpu.memory_space<vmem>>, vector<64x8xf32>
    %cst_7 = arith.constant dense<0.000000e+00> : vector<8x8xf32>
    %9 = tpu.matmul %7, %8, %cst_7 {dimension_numbers = #tpu.dot_dimension_numbers<[1], [0], [0], [1], [0, 0, 1, 1], [], []>} : vector<8x64xf32>, vector<64x8xf32>, vector<8x8xf32> -> vector<8x8xf32>
    %c0_8 = arith.constant 0 : index
    %c0_9 = arith.constant 0 : index
    %10 = vector.load %arg5[%c0_8, %c0_9] : memref<8x8xf32, #tpu.memory_space<vmem>>, vector<8x8xf32>
    tpu.vector_store %arg5[%c0_8, %c0_9], %9 {strides = array<i32>} : memref<8x8xf32, #tpu.memory_space<vmem>>, vector<8x8xf32>,
    return
  }
  func.func @transform_0(%arg0: i32) -> (i32, i32) {
    %c0_i32 = arith.constant 0 : i32
    %c0_i32_0 = arith.constant 0 : i32
    return %arg0, %c0_i32 : i32, i32
  }
  func.func @transform_1(%arg0: i32) -> (i32, i32) {
    %c0_i32 = arith.constant 0 : i32
    %c0_i32_0 = arith.constant 0 : i32
    %c0_i32_1 = arith.constant 0 : i32
    return %c0_i32, %c0_i32_0 : i32, i32
  }
  func.func @transform_2(%arg0: i32) -> (i32, i32) {
    %c0_i32 = arith.constant 0 : i32
    %c0_i32_0 = arith.constant 0 : i32
    %c0_i32_1 = arith.constant 0 : i32
    return %c0_i32, %c0_i32_0 : i32, i32
  }
  func.func @transform_3(%arg0: i32) -> (i32, i32) {
    %c0_i32 = arith.constant 0 : i32
    %c0_i32_0 = arith.constant 0 : i32
    %c0_i32_1 = arith.constant 0 : i32
    return %c0_i32, %c0_i32_0 : i32, i32
  }
  func.func @transform_4(%arg0: i32) -> (i32, i32) {
    %c0_i32 = arith.constant 0 : i32
    %c0_i32_0 = arith.constant 0 : i32
    return %arg0, %c0_i32 : i32, i32
  }
}

</mosaic_0001>

<llo_original>
// kernel: _forward_impl.1
$region0: #{_forward_impl.1}
  #allocation0 [shape = 'u32[]', space=smem, size = 0x4, offset = 0x4, fixed_abs, tag = 'smem constant byte address 0x4 - core index']
  #allocation1 [shape = 'u32[144,128]{1,0:T(1,128)}', space=vmem, size = 0x12000, scoped, tag = 'internal scratch']
  %s0 = inlined_call_operand.vmem [shape: f32[8,80], index: 0, kind: input, shape index: {}]
  %s1 = inlined_call_operand.vmem [shape: bf16[80,64], index: 1, kind: input, shape index: {}]
  %s2 = inlined_call_operand.vmem [shape: f32[1,64], index: 2, kind: input, shape index: {}]
  %s3 = inlined_call_operand.vmem [shape: f32[64,8], index: 3, kind: input, shape index: {}]
  %s4 = inlined_call_operand.vmem [shape: f32[8,8], index: 4, kind: output, shape index: {}]
  %s5 = sld [smem:[#allocation0]]
  $region26: #{_forward_impl.1} parent=0
    _
  %s7 = ssub.s32 1, %s5
  %s8 = scalar_select 0, %s7, %s5
  // Predicated region
  $region2: #{_forward_impl.1} parent=0 // pred_check
    _
  $region3: #{_forward_impl.1} parent=0 // pred_check_branch
    %10 = sbr.rel (0) target = $region5
  $region4: #{_forward_impl.1} parent=0 // pred_region
    _
  $region5: #{_forward_impl.1} parent=0 // pred_fallthru
    _
  // Predicated region
  $region6: #{_forward_impl.1} parent=0 // pred_check
    _
  $region7: #{_forward_impl.1} parent=0 // pred_check_branch
    %12 = sbr.rel (0) target = $region9
  $region8: #{_forward_impl.1} parent=0 // pred_region
    _
  $region9: #{_forward_impl.1} parent=0 // pred_fallthru
    _
  // Predicated region
  $region10: #{_forward_impl.1} parent=0 // pred_check
    _
  $region11: #{_forward_impl.1} parent=0 // pred_check_branch
    %14 = sbr.rel (0) target = $region13
  $region12: #{_forward_impl.1} parent=0 // pred_region
    _
  $region13: #{_forward_impl.1} parent=0 // pred_fallthru
    _
  // Predicated region
  $region14: #{_forward_impl.1} parent=0 // pred_check
    _
  $region15: #{_forward_impl.1} parent=0 // pred_check_branch
    %16 = sbr.rel (0) target = $region17
  $region16: #{_forward_impl.1} parent=0 // pred_region
    _
  $region17: #{_forward_impl.1} parent=0 // pred_fallthru
    _
  %v18 = vld [vmem:[%s0] sm:$0xff]
  %v19 = vpack.c.bf16 %v18, %v18
  %v20 = vld [vmem:[%s1] sm:$0xf]
  %v21 = vld [vmem:[%s1 + $0x4] sm:$0xf]
  %v22 = vld [vmem:[%s1 + $0x8] sm:$0xf]
  %v23 = vld [vmem:[%s1 + $0xc] sm:$0xf]
  %v24 = vld [vmem:[%s1 + $0x10] sm:$0xf]
  %v25 = vld [vmem:[%s1 + $0x14] sm:$0xf]
  %v26 = vld [vmem:[%s1 + $0x18] sm:$0xf]
  %v27 = vld [vmem:[%s1 + $0x1c] sm:$0xf]
  %v28 = vld [vmem:[%s1 + $0x20] sm:$0xf]
  %v29 = vld [vmem:[%s1 + $0x24] sm:$0xf]
  %v30 = vld [vmem:[%s2] sm:$0x1]
  %v32 = vlaneseq
  %v33 = vshrl.u32 %v32, 7
  %v34 = vsub.s32 0, %v33
  %v35 = vrot.slane %v30, %v34
  %v47 = vunpack.c.l.b16 %v20
  %v48 = vunpack.c.l.b16 %v21
  %v49 = vunpack.c.l.b16 %v22
  %v50 = vunpack.c.l.b16 %v23
  %v51 = vunpack.c.l.b16 %v24
  %v52 = vunpack.c.l.b16 %v25
  %v53 = vunpack.c.l.b16 %v26
  %v54 = vunpack.c.l.b16 %v27
  %v55 = vunpack.c.l.b16 %v28
  %v56 = vunpack.c.l.b16 %v29
  %v57 = vpack.c.b16 %v48, %v47
  %v58 = vpack.c.b16 %v50, %v49
  %v59 = vpack.c.b16 %v52, %v51
  %v60 = vpack.c.b16 %v54, %v53
  %v61 = vpack.c.b16 %v56, %v55
  %vm67 = vcmask 654336
  %v69 = vsel %vm67, %v19, 0
  %71 = vmatprep.subr.bf16.mxu0 0
  %72 = vmatpush1.bf16.msra.mxu0 %v57
  %73 = vmatprep.subr.bf16.mxu0 0
  %74 = vmatpush1.bf16.msra.mxu0 %v58
  %75 = vmatprep.subr.bf16.mxu0 0
  %76 = vmatpush1.bf16.msra.mxu0 %v59
  %77 = vmatprep.subr.bf16.mxu0 0
  %78 = vmatpush1.bf16.msra.mxu0 %v60
  %79 = vmatprep.subr.bf16.mxu0 0
  %80 = vmatpush1.bf16.msra.mxu0 %v61
  %81 = vmatprep.subr.bf16.mxu0 0
  %82 = vmatpush1.bf16.msra.mxu0 0
  %83 = vmatprep.subr.bf16.mxu0 0
  %84 = vmatpush1.bf16.msra.mxu0 0
  %85 = vmatprep.subr.bf16.mxu0 0
  %86 = vmatpush1.bf16.msra.mxu0 0
  %87 = vmatprep.subr.bf16.mxu0 0
  %88 = vmatpush1.bf16.msra.mxu0 0
  %89 = vmatprep.subr.bf16.mxu0 0
  %90 = vmatpush1.bf16.msra.mxu0 0
  %91 = vmatprep.subr.bf16.mxu0 0
  %92 = vmatpush1.bf16.msra.mxu0 0
  %93 = vmatprep.subr.bf16.mxu0 0
  %94 = vmatpush1.bf16.msra.mxu0 0
  %95 = vmatprep.subr.bf16.mxu0 0
  %96 = vmatpush1.bf16.msra.mxu0 0
  %97 = vmatprep.subr.bf16.mxu0 0
  %98 = vmatpush1.bf16.msra.mxu0 0
  %99 = vmatprep.subr.bf16.mxu0 0
  %100 = vmatpush1.bf16.msra.mxu0 0
  %101 = vmatprep.subr.bf16.mxu0 0
  %102 = vmatpush1.bf16.msra.mxu0 0
  %103 = vmatprep.mubr.bf16.mxu0 0
  %104 = vmatmul.mubr.bf16.gmra.mrb[0].mxu0 %v69
  %v105 = vpop.f32.mrb[0].mxu0
  %v106 = vadd.f32 %v35, %v105
  %v107 = vpop.f32.mrb[0].mxu0
  %v108 = vpop.f32.mrb[0].mxu0
  %v109 = vpop.f32.mrb[0].mxu0
  %110 = vdwg.mxu0
  %v111 = vtanh.pop %v106
  %v112 = vld [vmem:[%s3] sm:$0xff]
  %v113 = vld [vmem:[%s3 + $0x8] sm:$0xff]
  %v114 = vld [vmem:[%s3 + $0x10] sm:$0xff]
  %v115 = vld [vmem:[%s3 + $0x18] sm:$0xff]
  %v116 = vld [vmem:[%s3 + $0x20] sm:$0xff]
  %v117 = vld [vmem:[%s3 + $0x28] sm:$0xff]
  %v118 = vld [vmem:[%s3 + $0x30] sm:$0xff]
  %v119 = vld [vmem:[%s3 + $0x38] sm:$0xff]
  %vm120 = vcmask 523264
  %v122 = vsel %vm120, %v111, 0
  %124 = vmatprep.subr.mxu0 0.0
  %125 = vmatpush1.msra.mxu0 %v112
  %126 = vmatprep.subr.mxu0 0.0
  %127 = vmatpush1.msra.mxu0 %v113
  %128 = vmatprep.subr.mxu0 0.0
  %129 = vmatpush1.msra.mxu0 %v114
  %130 = vmatprep.subr.mxu0 0.0
  %131 = vmatpush1.msra.mxu0 %v115
  %132 = vmatprep.subr.mxu0 0.0
  %133 = vmatpush1.msra.mxu0 %v116
  %134 = vmatprep.subr.mxu0 0.0
  %135 = vmatpush1.msra.mxu0 %v117
  %136 = vmatprep.subr.mxu0 0.0
  %137 = vmatpush1.msra.mxu0 %v118
  %138 = vmatprep.subr.mxu0 0.0
  %139 = vmatpush1.msra.mxu0 %v119
  %140 = vmatprep.subr.mxu0 0.0
  %141 = vmatpush1.msra.mxu0 0.0
  %142 = vmatprep.subr.mxu0 0.0
  %143 = vmatpush1.msra.mxu0 0.0
  %144 = vmatprep.subr.mxu0 0.0
  %145 = vmatpush1.msra.mxu0 0.0
  %146 = vmatprep.subr.mxu0 0.0
  %147 = vmatpush1.msra.mxu0 0.0
  %148 = vmatprep.subr.mxu0 0.0
  %149 = vmatpush1.msra.mxu0 0.0
  %150 = vmatprep.subr.mxu0 0.0
  %151 = vmatpush1.msra.mxu0 0.0
  %152 = vmatprep.subr.mxu0 0.0
  %153 = vmatpush1.msra.mxu0 0.0
  %154 = vmatprep.subr.mxu0 0.0
  %155 = vmatpush1.msra.mxu0 0.0
  %156 = vmatprep.subr.mxu0 0.0
  %157 = vmatpush1.msra.mxu0 0.0
  %158 = vmatprep.subr.mxu0 0.0
  %159 = vmatpush1.msra.mxu0 0.0
  %160 = vmatprep.subr.mxu0 0.0
  %161 = vmatpush1.msra.mxu0 0.0
  %162 = vmatprep.subr.mxu0 0.0
  %163 = vmatpush1.msra.mxu0 0.0
  %164 = vmatprep.subr.mxu0 0.0
  %165 = vmatpush1.msra.mxu0 0.0
  %166 = vmatprep.subr.mxu0 0.0
  %167 = vmatpush1.msra.mxu0 0.0
  %168 = vmatprep.subr.mxu0 0.0
  %169 = vmatpush1.msra.mxu0 0.0
  %170 = vmatprep.subr.mxu0 0.0
  %171 = vmatpush1.msra.mxu0 0.0
  %172 = vmatprep.subr.mxu0 0.0
  %173 = vmatpush1.msra.mxu0 0.0
  %174 = vmatprep.subr.mxu0 0.0
  %175 = vmatpush1.msra.mxu0 0.0
  %176 = vmatprep.subr.mxu0 0.0
  %177 = vmatpush1.msra.mxu0 0.0
  %178 = vmatprep.subr.mxu0 0.0
  %179 = vmatpush1.msra.mxu0 0.0
  %180 = vmatprep.subr.mxu0 0.0
  %181 = vmatpush1.msra.mxu0 0.0
  %182 = vmatprep.subr.mxu0 0.0
  %183 = vmatpush1.msra.mxu0 0.0
  %184 = vmatprep.subr.mxu0 0.0
  %185 = vmatpush1.msra.mxu0 0.0
  %186 = vmatprep.subr.mxu0 0.0
  %187 = vmatpush1.msra.mxu0 0.0
  %188 = vmatprep.mubr.f32.mxu0 0.0
  %189 = vmatmul.mubr.f32.gmra.mrb[0].mxu0 %v122
  %v190 = vpop.f32.mrb[0].mxu0
  %v191 = vadd.f32 0.0, %v190
  %v192 = vpop.f32.mrb[0].mxu0
  %193 = vdwg.mxu0
  %vm194 = vcmask 64512
  %195 = vst.msk [vmem:[%s4] sm:$0xff] %vm194, %v191
  // Predicated region
  $region18: #{_forward_impl.1} parent=0 // pred_check
    _
  $region19: #{_forward_impl.1} parent=0 // pred_check_branch
    %197 = sbr.rel (0) target = $region21
  $region20: #{_forward_impl.1} parent=0 // pred_region
    _
  $region21: #{_forward_impl.1} parent=0 // pred_fallthru
    _
  // Predicated region
  $region22: #{_forward_impl.1} parent=0 // pred_check
    _
  $region23: #{_forward_impl.1} parent=0 // pred_check_branch
    %199 = sbr.rel (0) target = $region25
  $region24: #{_forward_impl.1} parent=0 // pred_region
    _
  $region25: #{_forward_impl.1} parent=0 // pred_fallthru
    _

</llo_original>
